<compile_context>
chip_gen: v7x
topology: tpu7x:2x2x1
jax: 0.10.0
libtpu: 0.0.40
codegen_flags: <defaults>
</compile_context>

<pallas_src>
import functools

import numpy as np
import jax
import jax.numpy as jnp
from jax.experimental import pallas as pl
from jax.experimental.pallas import tpu as pltpu


# ----------------------------------------------------------------------------
# Pallas helpers
# ----------------------------------------------------------------------------
def _full_spec(shape):
    """Whole-array block (no grid)."""
    return pl.BlockSpec(shape, lambda: (0,) * len(shape))


def _align8(x):
    return ((x + 7) // 8) * 8


# ----------------------------------------------------------------------------
# The single fused kernel: GCN trunk + batched bilinear scoring + loss.
# Everything edge-related is computed TRANSPOSED: edges on the lane axis.
# ----------------------------------------------------------------------------
def _hnepy_kernel(feat_ref, at_ref, slab_ref, gath_ref, cost_ref, sims_ref,
                  *, off, r1, r2, r3, K, e_pad, ni, n_edges, nb):
    f32 = jnp.float32

    def mm(a, b):
        return jnp.dot(a, b, preferred_element_type=f32)

    def blk(name):
        r0, nr, nc = off[name]               # static python ints -> cheap view
        return slab_ref[r0:r0 + nr, 0:nc]

    # ---------------- unpack the parameter slab (static slices) ----------------
    w_e = blk("we")                                   # (r1, d1+d2+d3+3) incl. biases
    g1 = blk("g1")
    w_g1, b_g1 = g1[:, 0:r1], g1[:, r1:r1 + 1]        # (r2, r1), (r2, 1)
    g2 = blk("g2")
    w_g2, b_g2 = g2[:, 0:r2], g2[:, r2:r2 + 1]        # (r3, r2), (r3, 1)
    b12t = blk("b12")                                 # (2*r3, r3) = [B1^T ; B2^T]
    b3t = blk("b3")                                   # (r3, r3)  = B3^T
    head = blk("head")                                # (K, r3+4)
    w_b2t, b_b2 = head[:, 0:r3], head[:, r3:r3 + 1]
    b_lin = head[:, r3 + 1:r3 + 2]
    w_sim = head[:, r3 + 2:r3 + 3]
    b_sim = head[0:1, r3 + 3:r3 + 4]

    # ---------------- GCN trunk, fully transposed (nodes on lanes) -------------
    x_t = jnp.tanh(mm(w_e, feat_ref[...]))            # (r1, N) incl. per-section bias
    ax_t = mm(x_t, at_ref[...])                       # (r1, N) = (A @ X)^T
    h_t = jnp.tanh(mm(w_g1, ax_t) + b_g1)             # (r2, N)
    emb_t = mm(w_g2, h_t) + b_g2                      # (r3, N)

    # ---------------- one fused gather matmul: edges / edge-slots on lanes -----
    g = mm(emb_t, gath_ref[...])                      # (r3, (4 + 2*ni) * e_pad)
    drug_t = g[:, 0 * e_pad:1 * e_pad]                # (r3, E)  the single drug row
    isum_t = g[:, 1 * e_pad:2 * e_pad]                # (r3, E)  sum of indi rows
    asum_t = g[:, 2 * e_pad:3 * e_pad]                # (r3, E)  sum of adr rows
    mean_t = g[:, 3 * e_pad:4 * e_pad]                # (r3, E)  mean row for B2 Linear
    islot_t = g[:, 4 * e_pad:(4 + ni) * e_pad]        # (r3, ni*E)  i-th indi row
    tslot_t = g[:, (4 + ni) * e_pad:(4 + 2 * ni) * e_pad]  # (r3, ni*E) sum_{j>i} adr_j

    # ---------------- bilinear terms: fused MXU push + VPU mul + sublane reduce -
    d_b12 = mm(b12t, drug_t)                          # (2*r3, E)
    s1 = jnp.sum(d_b12[0:r3, :] * isum_t, axis=0, keepdims=True)        # (1, E)
    s2 = jnp.sum(d_b12[r3:2 * r3, :] * asum_t, axis=0, keepdims=True)   # (1, E)

    # b3 = sum(triu(indi @ B3 @ adr^T, 1)): per-slot dot with strict-suffix adr
    # sums; per-edge reduction over slots = sum of static 128-aligned lane slices.
    i_b3 = mm(b3t, islot_t)                           # (r3, ni*E)
    col3 = jnp.sum(i_b3 * tslot_t, axis=0, keepdims=True)               # (1, ni*E)
    s3 = col3[:, 0:e_pad]
    for i in range(1, ni):
        s3 = s3 + col3[:, i * e_pad:(i + 1) * e_pad]                    # (1, E)

    # B2 = mean(Linear_K(cat([drug, indi, adr], 0)), 0) -> affine on the mean row
    proj_t = mm(w_b2t, mean_t) + b_b2                 # (K, E)

    sub = jax.lax.broadcasted_iota(jnp.int32, (K, e_pad), 0)
    bmat_t = jnp.where(sub == 0, s1, jnp.where(sub == 1, s2, s3))        # rows [s1;s2;s3]
    z_t = jnp.tanh(bmat_t + proj_t + b_lin)           # (K, E)
    sims = jnp.sum(z_t * w_sim, axis=0, keepdims=True) + b_sim           # (1, E) lane-dense
    sims_ref[...] = sims.astype(sims_ref.dtype)

    # ---------------- logistic cost: pos = lanes [0, nb), neg = [nb, n_edges) ---
    lane = jax.lax.broadcasted_iota(jnp.int32, (1, e_pad), 1)
    pos_m = (lane < nb).astype(f32)
    neg_m = jnp.logical_and(lane >= nb, lane < n_edges).astype(f32)
    sum_se0 = jnp.sum(sims * neg_m, axis=1, keepdims=True) / float(n_edges - nb)
    terms = jnp.log(1.0 + jnp.exp(sum_se0 - sims)) * pos_m               # ref-faithful
    cost = jnp.sum(terms, axis=1, keepdims=True) / float(nb)
    cost_ref[...] = cost.astype(cost_ref.dtype)


def hnepy_forward_pallas(feat_t, a_t, slab, gath, *, off, r1, r2, r3, K,
                         e_pad, ni, n_edges, nb):
    """Whole HNEPY forward (post host-side table construction) as one pallas_call."""
    kernel = functools.partial(_hnepy_kernel, off=off, r1=r1, r2=r2, r3=r3, K=K,
                               e_pad=e_pad, ni=ni, n_edges=n_edges, nb=nb)
    cost, sims = pl.pallas_call(
        kernel,
        out_shape=(jax.ShapeDtypeStruct((1, 1), jnp.float32),
                   jax.ShapeDtypeStruct((1, e_pad), jnp.float32)),
        in_specs=[_full_spec(feat_t.shape), _full_spec(a_t.shape),
                  _full_spec(slab.shape), _full_spec(gath.shape)],
        out_specs=(_full_spec((1, 1)), _full_spec((1, e_pad))),
        compiler_params=pltpu.CompilerParams(vmem_limit_bytes=32 * 1024 * 1024),
    )(feat_t, a_t, slab, gath)
    return cost[0, 0], sims[0, :n_edges]


# ----------------------------------------------------------------------------
# Host-side (numpy) preprocessing: edge parsing -> ONE dense gather table,
# parameters -> ONE transposed 128-lane slab, features -> ONE augmented block.
# ----------------------------------------------------------------------------
def parse_edges(pos_edges, neg_edges, cfg):
    d1c, d2c, d3c = cfg["d1"], cfg["d2"], cfg["d3"]
    parsed = []
    for e in list(pos_edges) + list(neg_edges):
        e = np.asarray(e)
        e = e[e.sum(axis=1) != 0].astype(np.int64)     # the sum != 0 row filter
        emb_idx, dims = e[:, 1], e[:, 0]
        dr = emb_idx[dims == d1c]
        ii = emb_idx[dims == d2c]
        aa = emb_idx[dims == d3c]
        assert dr.shape[0] == 1, "reference semantics require exactly one drug row/edge"
        parsed.append((int(dr[0]), [int(v) for v in ii], [int(v) for v in aa]))
    return parsed


def build_gather_table(parsed, cfg, e_pad):
    """One (N, (4 + 2*NI)*E_pad) table: drug 1-hot | indi m-hot | adr m-hot |
    inv-count-scaled mean row | per-slot indi 1-hot | per-slot strict-suffix adr."""
    n1, n2, n3 = cfg["n1"], cfg["n2"], cfg["n3"]
    N = n1 + n2 + n3
    ni = max(1, max((len(ii) for _, ii, _ in parsed), default=1))
    tab = np.zeros((N, (4 + 2 * ni) * e_pad), np.float32)
    for e, (dr, ii, aa) in enumerate(parsed):
        tab[dr, 0 * e_pad + e] += 1.0                       # d1_eb = emb[:n1]
        for v in ii:
            tab[n1 + v, 1 * e_pad + e] += 1.0               # d2_eb = emb[n1:n1+n2]
        for v in aa:
            tab[n2 + v, 2 * e_pad + e] += 1.0               # d3_eb = emb[n2:n2+n3] (ref bug)
        cnt = 1.0 + len(ii) + len(aa)
        tab[:, 3 * e_pad + e] = (tab[:, 0 * e_pad + e] + tab[:, 1 * e_pad + e]
                                 + tab[:, 2 * e_pad + e]) / cnt
        for i in range(len(ii)):                            # slot-major layout
            tab[n1 + ii[i], (4 + i) * e_pad + e] += 1.0
            for j in range(i + 1, len(aa)):                 # triu(diagonal=1) pairs
                tab[n2 + aa[j], (4 + ni + i) * e_pad + e] += 1.0
    return tab, ni


def build_feature_block(d1_fea, d2_fea, d3_fea, cfg):
    """Block-diagonal, transposed feature matrix + 3 bias-indicator rows."""
    d1c, d2c, d3c = cfg["d1"], cfg["d2"], cfg["d3"]
    n1, n2, n3 = cfg["n1"], cfg["n2"], cfg["n3"]
    dsum, N = d1c + d2c + d3c, n1 + n2 + n3
    f = np.zeros((dsum + 3, N), np.float32)
    f[0:d1c, 0:n1] = np.asarray(d1_fea, np.float32).T
    f[d1c:d1c + d2c, n1:n1 + n2] = np.asarray(d2_fea, np.float32).T
    f[d1c + d2c:dsum, n1 + n2:N] = np.asarray(d3_fea, np.float32).T
    f[dsum + 0, 0:n1] = 1.0
    f[dsum + 1, n1:n1 + n2] = 1.0
    f[dsum + 2, n1 + n2:N] = 1.0
    return f


def pack_param_slab(p, cfg):
    """Pack ALL parameters (pre-transposed) into one (rows, 128) f32 slab."""
    d1c, d2c, d3c = cfg["d1"], cfg["d2"], cfg["d3"]
    r1, r2, r3, K = cfg["r1"], cfg["r2"], cfg["r3"], cfg["K"]
    dsum = d1c + d2c + d3c

    def a(x):
        return np.asarray(x, np.float32)

    we = np.zeros((r1, dsum + 3), np.float32)
    we[:, 0:d1c] = a(p["w_e1"]).T
    we[:, d1c:d1c + d2c] = a(p["w_e2"]).T
    we[:, d1c + d2c:dsum] = a(p["w_e3"]).T
    we[:, dsum + 0] = a(p["b_e1"]).reshape(-1)
    we[:, dsum + 1] = a(p["b_e2"]).reshape(-1)
    we[:, dsum + 2] = a(p["b_e3"]).reshape(-1)

    g1 = np.concatenate([a(p["w_g1"]).T, a(p["b_g1"]).reshape(r2, 1)], axis=1)
    g2 = np.concatenate([a(p["w_g2"]).T, a(p["b_g2"]).reshape(r3, 1)], axis=1)
    b12 = np.concatenate([a(p["b1"]).T, a(p["b2"]).T], axis=0)          # [B1^T; B2^T]
    b3 = a(p["b3"]).T
    bsim_col = np.zeros((K, 1), np.float32)
    bsim_col[0, 0] = float(a(p["bsim"]).reshape(()))
    head = np.concatenate([a(p["wB2"]).T, a(p["bB2"]).reshape(K, 1),
                           a(p["b_lin"]).reshape(K, 1), a(p["wsim"]).reshape(K, 1),
                           bsim_col], axis=1)                           # (K, r3+4)

    blocks = [("we", we), ("g1", g1), ("g2", g2), ("b12", b12), ("b3", b3),
              ("head", head)]
    off, row = {}, 0
    for name, arr in blocks:
        off[name] = (row, arr.shape[0], arr.shape[1])
        row = _align8(row + arr.shape[0])
    slab = np.zeros((max(8, row), 128), np.float32)
    for name, arr in blocks:
        r0, nr, nc = off[name]
        slab[r0:r0 + nr, 0:nc] = arr
    return slab, off


# ----------------------------------------------------------------------------
# Pure-JAX reference (mirrors the torch module directly) for validation.
# ----------------------------------------------------------------------------
def hnepy_reference(pos_edges, neg_edges, d1_fea, d2_fea, d3_fea, A, p, cfg):
    n1, n2, n3 = cfg["n1"], cfg["n2"], cfg["n3"]
    d1c, d2c, d3c = cfg["d1"], cfg["d2"], cfg["d3"]
    x1 = jnp.tanh(d1_fea @ p["w_e1"] + p["b_e1"])
    x2 = jnp.tanh(d2_fea @ p["w_e2"] + p["b_e2"])
    x3 = jnp.tanh(d3_fea @ p["w_e3"] + p["b_e3"])
    X = jnp.concatenate([x1, x2, x3], axis=0)
    h = jnp.tanh((A @ X) @ p["w_g1"] + p["b_g1"])
    emb = h @ p["w_g2"] + p["b_g2"]
    d1_eb = emb[:n1]
    d2_eb = emb[n1:n1 + n2]
    d3_eb = emb[n2:n2 + n3]      # reference slice bug, kept intentionally

    def sim_of(edge):
        e = np.asarray(edge)
        e = e[e.sum(axis=1) != 0].astype(np.int64)
        emb_idx, dims = e[:, 1], e[:, 0]
        drug = d1_eb[emb_idx[dims == d1c]]
        indi = d2_eb[emb_idx[dims == d2c]]
        adr = d3_eb[emb_idx[dims == d3c]]
        emb_matrix = jnp.concatenate([drug, indi, adr], axis=0)
        b1v = jnp.sum(drug @ p["b1"] @ indi.T)
        b2v = jnp.sum(drug @ p["b2"] @ adr.T)
        b3v = jnp.sum(jnp.triu(indi @ p["b3"] @ adr.T, k=1))
        B = jnp.stack([b1v, b2v, b3v]).reshape(1, 3)
        B2m = jnp.mean(emb_matrix @ p["wB2"] + p["bB2"], axis=0, keepdims=True)
        return (jnp.tanh(B + B2m + p["b_lin"]) @ p["wsim"] + p["bsim"])[0, 0]

    Se = jnp.stack([sim_of(e) for e in pos_edges])
    Se0 = jnp.stack([sim_of(e) for e in neg_edges])
    sum_Se0 = jnp.mean(Se0)
    cost = jnp.mean(jnp.log(1.0 + jnp.exp(sum_Se0 - Se)))
    return cost, jnp.concatenate([Se, Se0])


# ----------------------------------------------------------------------------
# Deterministic setup + run
# ----------------------------------------------------------------------------
if __name__ == "__main__":
    # K must be 3; d1/d2/d3 act as both feature sizes and integer "type codes"
    # inside the edge index tensors, exactly as in the reference.
    K = 3
    d1c, d2c, d3c = 10, 12, 14
    n1, n2, n3 = 8, 8, 8
    r1, r2, r3 = 16, 16, 8
    N = n1 + n2 + n3
    cfg = dict(K=K, d1=d1c, d2=d2c, d3=d3c, n1=n1, n2=n2, n3=n3, r1=r1, r2=r2, r3=r3)
    assert K == 3, "Get_bilinear_sim is only well defined for K == 3"

    key = jax.random.PRNGKey(0)
    ks = jax.random.split(key, 24)

    def rnd(k, shape, scale=0.1):
        return (scale * jax.random.normal(k, shape)).astype(jnp.float32)

    params = {
        # embedding Linears (stored transposed: (in, out)) + biases as (1, out)
        "w_e1": rnd(ks[0], (d1c, r1)), "b_e1": rnd(ks[1], (1, r1)),
        "w_e2": rnd(ks[2], (d2c, r1)), "b_e2": rnd(ks[3], (1, r1)),
        "w_e3": rnd(ks[4], (d3c, r1)), "b_e3": rnd(ks[5], (1, r1)),
        # GCNN
        "w_g1": rnd(ks[6], (r1, r2)), "b_g1": rnd(ks[7], (1, r2)),
        "w_g2": rnd(ks[8], (r2, r3)), "b_g2": rnd(ks[9], (1, r3)),
        # bilinear similarity parameters
        "b1": rnd(ks[10], (r3, r3), 1.0),
        "b2": rnd(ks[11], (r3, r3), 1.0),
        "b3": rnd(ks[12], (r3, r3), 1.0),
        "wB2": rnd(ks[13], (r3, K)), "bB2": rnd(ks[14], (1, K)),
        "b_lin": rnd(ks[15], (1, K), 1.0),
        "wsim": rnd(ks[16], (K, 1)), "bsim": rnd(ks[17], (1, 1)),
    }

    d1_fea = rnd(ks[18], (n1, d1c), 1.0)
    d2_fea = rnd(ks[19], (n2, d2c), 1.0)
    d3_fea = rnd(ks[20], (n3, d3c), 1.0)
    A = rnd(ks[21], (N, N), 1.0)

    # Synthetic edges: 1 drug row (code d1), 2 indication rows (d2), 2 ADR rows
    # (d3) and one all-zero padding row that the sum!=0 filter removes.
    def make_edge(seed):
        rows = [
            [d1c, seed % n1],
            [d2c, (seed + 1) % n2], [d2c, (seed + 3) % n2],
            [d3c, (seed + 2) % n3], [d3c, (seed + 5) % n3],
            [0, 0],
        ]
        return np.asarray(rows, dtype=np.int32)

    pos_edges = [make_edge(s) for s in range(4)]
    neg_edges = [make_edge(s + 17) for s in range(4)]
    nb = len(pos_edges)

    # -------- host-side preprocessing: 4 dense inputs, all lane-friendly --------
    parsed = parse_edges(pos_edges, neg_edges, cfg)
    n_edges = len(parsed)
    assert 0 < nb < n_edges
    e_pad = ((n_edges + 127) // 128) * 128          # lane-dense padded edge count
    gath, ni = build_gather_table(parsed, cfg, e_pad)
    feat_t = build_feature_block(d1_fea, d2_fea, d3_fea, cfg)
    slab, off = pack_param_slab(params, cfg)
    a_t = np.asarray(A, np.float32).T               # pre-transposed adjacency

    fwd = jax.jit(functools.partial(
        hnepy_forward_pallas, off=off, r1=r1, r2=r2, r3=r3, K=K,
        e_pad=e_pad, ni=ni, n_edges=n_edges, nb=nb))
    cost, sims = fwd(jnp.asarray(feat_t), jnp.asarray(a_t),
                     jnp.asarray(slab), jnp.asarray(gath))
    cost, sims = jax.block_until_ready((cost, sims))

    # Validate against a pure-JAX reference of the torch module.
    ref_cost, ref_sims = hnepy_reference(pos_edges, neg_edges,
                                         d1_fea, d2_fea, d3_fea, A, params, cfg)
    np.testing.assert_allclose(np.asarray(sims), np.asarray(ref_sims),
                               rtol=1e-3, atol=1e-4)
    np.testing.assert_allclose(np.asarray(cost), np.asarray(ref_cost),
                               rtol=1e-3, atol=1e-4)
    assert cost.shape == () and np.isfinite(np.asarray(cost))
    print("KERNEL_OK")
</pallas_src>

<mosaic_0001>
module attributes {stable_mosaic.version = 11 : i64} {
  func.func @_hnepy_kernel(%arg0: memref<39x24xf32, #tpu.memory_space<vmem>>, %arg1: memref<24x24xf32, #tpu.memory_space<vmem>>, %arg2: memref<72x128xf32, #tpu.memory_space<vmem>>, %arg3: memref<24x1024xf32, #tpu.memory_space<vmem>>, %arg4: memref<1x1xf32, #tpu.memory_space<vmem>>, %arg5: memref<1x128xf32, #tpu.memory_space<vmem>>) attributes {dimension_semantics = [], scalar_prefetch = 0 : i64, scratch_operands = 0 : i64, tpu.core_type = #tpu.core_type<tc>} {
    %c0 = arith.constant 0 : index
    %c0_0 = arith.constant 0 : index
    %0 = vector.load %arg2[%c0, %c0_0] : memref<72x128xf32, #tpu.memory_space<vmem>>, vector<16x39xf32>
    %c16 = arith.constant 16 : index
    %c0_1 = arith.constant 0 : index
    %1 = vector.load %arg2[%c16, %c0_1] : memref<72x128xf32, #tpu.memory_space<vmem>>, vector<16x17xf32>
    %2 = vector.extract_strided_slice %1 {offsets = [0, 0], sizes = [16, 16], strides = [1, 1]} : vector<16x17xf32> to vector<16x16xf32>
    %3 = vector.extract_strided_slice %1 {offsets = [0, 16], sizes = [16, 1], strides = [1, 1]} : vector<16x17xf32> to vector<16x1xf32>
    %c32 = arith.constant 32 : index
    %c0_2 = arith.constant 0 : index
    %4 = vector.load %arg2[%c32, %c0_2] : memref<72x128xf32, #tpu.memory_space<vmem>>, vector<8x17xf32>
    %5 = vector.extract_strided_slice %4 {offsets = [0, 0], sizes = [8, 16], strides = [1, 1]} : vector<8x17xf32> to vector<8x16xf32>
    %6 = vector.extract_strided_slice %4 {offsets = [0, 16], sizes = [8, 1], strides = [1, 1]} : vector<8x17xf32> to vector<8x1xf32>
    %c40 = arith.constant 40 : index
    %c0_3 = arith.constant 0 : index
    %7 = vector.load %arg2[%c40, %c0_3] : memref<72x128xf32, #tpu.memory_space<vmem>>, vector<16x8xf32>
    %c56 = arith.constant 56 : index
    %c0_4 = arith.constant 0 : index
    %8 = vector.load %arg2[%c56, %c0_4] : memref<72x128xf32, #tpu.memory_space<vmem>>, vector<8x8xf32>
    %c64 = arith.constant 64 : index
    %c0_5 = arith.constant 0 : index
    %9 = vector.load %arg2[%c64, %c0_5] : memref<72x128xf32, #tpu.memory_space<vmem>>, vector<3x12xf32>
    %10 = vector.extract_strided_slice %9 {offsets = [0, 0], sizes = [3, 8], strides = [1, 1]} : vector<3x12xf32> to vector<3x8xf32>
    %11 = vector.extract_strided_slice %9 {offsets = [0, 8], sizes = [3, 1], strides = [1, 1]} : vector<3x12xf32> to vector<3x1xf32>
    %12 = vector.extract_strided_slice %9 {offsets = [0, 9], sizes = [3, 1], strides = [1, 1]} : vector<3x12xf32> to vector<3x1xf32>
    %13 = vector.extract_strided_slice %9 {offsets = [0, 10], sizes = [3, 1], strides = [1, 1]} : vector<3x12xf32> to vector<3x1xf32>
    %14 = vector.extract_strided_slice %9 {offsets = [0, 11], sizes = [1, 1], strides = [1, 1]} : vector<3x12xf32> to vector<1x1xf32>
    %c0_6 = arith.constant 0 : index
    %c0_7 = arith.constant 0 : index
    %15 = vector.load %arg0[%c0_6, %c0_7] : memref<39x24xf32, #tpu.memory_space<vmem>>, vector<39x24xf32>
    %cst = arith.constant dense<0.000000e+00> : vector<16x24xf32>
    %16 = tpu.matmul %0, %15, %cst {dimension_numbers = #tpu.dot_dimension_numbers<[1], [0], [0], [1], [0, 0, 1, 1], [], []>} : vector<16x39xf32>, vector<39x24xf32>, vector<16x24xf32> -> vector<16x24xf32>
    %17 = math.tanh %16 : vector<16x24xf32>
    %c0_8 = arith.constant 0 : index
    %c0_9 = arith.constant 0 : index
    %18 = vector.load %arg1[%c0_8, %c0_9] : memref<24x24xf32, #tpu.memory_space<vmem>>, vector<24x24xf32>
    %cst_10 = arith.constant dense<0.000000e+00> : vector<16x24xf32>
    %19 = tpu.matmul %17, %18, %cst_10 {dimension_numbers = #tpu.dot_dimension_numbers<[1], [0], [0], [1], [0, 0, 1, 1], [], []>} : vector<16x24xf32>, vector<24x24xf32>, vector<16x24xf32> -> vector<16x24xf32>
    %cst_11 = arith.constant dense<0.000000e+00> : vector<16x24xf32>
    %20 = tpu.matmul %2, %19, %cst_11 {dimension_numbers = #tpu.dot_dimension_numbers<[1], [0], [0], [1], [0, 0, 1, 1], [], []>} : vector<16x16xf32>, vector<16x24xf32>, vector<16x24xf32> -> vector<16x24xf32>
    %21 = vector.broadcast %3 : vector<16x1xf32> to vector<16x24xf32>
    %22 = arith.addf %20, %21 : vector<16x24xf32>
    %23 = math.tanh %22 : vector<16x24xf32>
    %cst_12 = arith.constant dense<0.000000e+00> : vector<8x24xf32>
    %24 = tpu.matmul %5, %23, %cst_12 {dimension_numbers = #tpu.dot_dimension_numbers<[1], [0], [0], [1], [0, 0, 1, 1], [], []>} : vector<8x16xf32>, vector<16x24xf32>, vector<8x24xf32> -> vector<8x24xf32>
    %25 = vector.broadcast %6 : vector<8x1xf32> to vector<8x24xf32>
    %26 = arith.addf %24, %25 : vector<8x24xf32>
    %c0_13 = arith.constant 0 : index
    %c0_14 = arith.constant 0 : index
    %27 = vector.load %arg3[%c0_13, %c0_14] : memref<24x1024xf32, #tpu.memory_space<vmem>>, vector<24x1024xf32>
    %cst_15 = arith.constant dense<0.000000e+00> : vector<8x1024xf32>
    %28 = tpu.matmul %26, %27, %cst_15 {dimension_numbers = #tpu.dot_dimension_numbers<[1], [0], [0], [1], [0, 0, 1, 1], [], []>} : vector<8x24xf32>, vector<24x1024xf32>, vector<8x1024xf32> -> vector<8x1024xf32>
    %29 = vector.extract_strided_slice %28 {offsets = [0, 0], sizes = [8, 128], strides = [1, 1]} : vector<8x1024xf32> to vector<8x128xf32>
    %30 = vector.extract_strided_slice %28 {offsets = [0, 128], sizes = [8, 128], strides = [1, 1]} : vector<8x1024xf32> to vector<8x128xf32>
    %31 = vector.extract_strided_slice %28 {offsets = [0, 256], sizes = [8, 128], strides = [1, 1]} : vector<8x1024xf32> to vector<8x128xf32>
    %32 = vector.extract_strided_slice %28 {offsets = [0, 384], sizes = [8, 128], strides = [1, 1]} : vector<8x1024xf32> to vector<8x128xf32>
    %33 = vector.extract_strided_slice %28 {offsets = [0, 512], sizes = [8, 256], strides = [1, 1]} : vector<8x1024xf32> to vector<8x256xf32>
    %34 = vector.extract_strided_slice %28 {offsets = [0, 768], sizes = [8, 256], strides = [1, 1]} : vector<8x1024xf32> to vector<8x256xf32>
    %cst_16 = arith.constant dense<0.000000e+00> : vector<16x128xf32>
    %35 = tpu.matmul %7, %29, %cst_16 {dimension_numbers = #tpu.dot_dimension_numbers<[1], [0], [0], [1], [0, 0, 1, 1], [], []>} : vector<16x8xf32>, vector<8x128xf32>, vector<16x128xf32> -> vector<16x128xf32>
    %36 = vector.extract_strided_slice %35 {offsets = [0, 0], sizes = [8, 128], strides = [1, 1]} : vector<16x128xf32> to vector<8x128xf32>
    %37 = arith.mulf %36, %30 : vector<8x128xf32>
    %cst_17 = arith.constant dense<0.000000e+00> : vector<128xf32>
    %38 = vector.multi_reduction <add>, %37, %cst_17 [0] : vector<8x128xf32> to vector<128xf32>
    %39 = vector.shape_cast %38 : vector<128xf32> to vector<1x128xf32>
    %40 = vector.extract_strided_slice %35 {offsets = [8, 0], sizes = [8, 128], strides = [1, 1]} : vector<16x128xf32> to vector<8x128xf32>
    %41 = arith.mulf %40, %31 : vector<8x128xf32>
    %cst_18 = arith.constant dense<0.000000e+00> : vector<128xf32>
    %42 = vector.multi_reduction <add>, %41, %cst_18 [0] : vector<8x128xf32> to vector<128xf32>
    %43 = vector.shape_cast %42 : vector<128xf32> to vector<1x128xf32>
    %cst_19 = arith.constant dense<0.000000e+00> : vector<8x256xf32>
    %44 = tpu.matmul %8, %33, %cst_19 {dimension_numbers = #tpu.dot_dimension_numbers<[1], [0], [0], [1], [0, 0, 1, 1], [], []>} : vector<8x8xf32>, vector<8x256xf32>, vector<8x256xf32> -> vector<8x256xf32>
    %45 = arith.mulf %44, %34 : vector<8x256xf32>
    %cst_20 = arith.constant dense<0.000000e+00> : vector<256xf32>
    %46 = vector.multi_reduction <add>, %45, %cst_20 [0] : vector<8x256xf32> to vector<256xf32>
    %47 = vector.shape_cast %46 : vector<256xf32> to vector<1x256xf32>
    %48 = vector.extract_strided_slice %47 {offsets = [0, 0], sizes = [1, 128], strides = [1, 1]} : vector<1x256xf32> to vector<1x128xf32>
    %49 = vector.extract_strided_slice %47 {offsets = [0, 128], sizes = [1, 128], strides = [1, 1]} : vector<1x256xf32> to vector<1x128xf32>
    %50 = arith.addf %48, %49 : vector<1x128xf32>
    %cst_21 = arith.constant dense<0.000000e+00> : vector<3x128xf32>
    %51 = tpu.matmul %10, %32, %cst_21 {dimension_numbers = #tpu.dot_dimension_numbers<[1], [0], [0], [1], [0, 0, 1, 1], [], []>} : vector<3x8xf32>, vector<8x128xf32>, vector<3x128xf32> -> vector<3x128xf32>
    %52 = vector.broadcast %11 : vector<3x1xf32> to vector<3x128xf32>
    %53 = arith.addf %51, %52 : vector<3x128xf32>
    %54 = tpu.iota {dimensions = array<i32: 0>} : vector<3x128xi32>
    %c0_i32 = arith.constant 0 : i32
    %55 = vector.broadcast %c0_i32 : i32 to vector<3x128xi32>
    %56 = arith.cmpi eq, %54, %55 : vector<3x128xi32>
    %c1_i32 = arith.constant 1 : i32
    %57 = vector.broadcast %c1_i32 : i32 to vector<3x128xi32>
    %58 = arith.cmpi eq, %54, %57 : vector<3x128xi32>
    %59 = vector.shape_cast %43 : vector<1x128xf32> to vector<1x128xf32>
    %60 = vector.broadcast %59 : vector<1x128xf32> to vector<3x128xf32>
    %61 = vector.shape_cast %50 : vector<1x128xf32> to vector<1x128xf32>
    %62 = vector.broadcast %61 : vector<1x128xf32> to vector<3x128xf32>
    %63 = arith.select %58, %60, %62 : vector<3x128xi1>, vector<3x128xf32>
    %64 = vector.shape_cast %39 : vector<1x128xf32> to vector<1x128xf32>
    %65 = vector.broadcast %64 : vector<1x128xf32> to vector<3x128xf32>
    %66 = arith.select %56, %65, %63 : vector<3x128xi1>, vector<3x128xf32>
    %67 = arith.addf %66, %53 : vector<3x128xf32>
    %68 = vector.broadcast %12 : vector<3x1xf32> to vector<3x128xf32>
    %69 = arith.addf %67, %68 : vector<3x128xf32>
    %70 = math.tanh %69 : vector<3x128xf32>
    %71 = vector.broadcast %13 : vector<3x1xf32> to vector<3x128xf32>
    %72 = arith.mulf %70, %71 : vector<3x128xf32>
    %cst_22 = arith.constant dense<0.000000e+00> : vector<128xf32>
    %73 = vector.multi_reduction <add>, %72, %cst_22 [0] : vector<3x128xf32> to vector<128xf32>
    %74 = vector.shape_cast %73 : vector<128xf32> to vector<1x128xf32>
    %75 = vector.broadcast %14 : vector<1x1xf32> to vector<1x128xf32>
    %76 = arith.addf %74, %75 : vector<1x128xf32>
    %c0_23 = arith.constant 0 : index
    %c0_24 = arith.constant 0 : index
    %77 = vector.load %arg5[%c0_23, %c0_24] : memref<1x128xf32, #tpu.memory_space<vmem>>, vector<1x128xf32>
    tpu.vector_store %arg5[%c0_23, %c0_24], %76 {strides = array<i32>} : memref<1x128xf32, #tpu.memory_space<vmem>>, vector<1x128xf32>,
    %78 = tpu.iota {dimensions = array<i32: 1>} : vector<1x128xi32>
    %c4_i32 = arith.constant 4 : i32
    %79 = vector.broadcast %c4_i32 : i32 to vector<1x128xi32>
    %80 = arith.cmpi slt, %78, %79 : vector<1x128xi32>
    %81 = arith.extui %80 : vector<1x128xi1> to vector<1x128xi32>
    %82 = arith.sitofp %81 : vector<1x128xi32> to vector<1x128xf32>
    %c4_i32_25 = arith.constant 4 : i32
    %83 = vector.broadcast %c4_i32_25 : i32 to vector<1x128xi32>
    %84 = arith.cmpi sge, %78, %83 : vector<1x128xi32>
    %c8_i32 = arith.constant 8 : i32
    %85 = vector.broadcast %c8_i32 : i32 to vector<1x128xi32>
    %86 = arith.cmpi slt, %78, %85 : vector<1x128xi32>
    %87 = arith.andi %84, %86 : vector<1x128xi1>
    %88 = arith.extui %87 : vector<1x128xi1> to vector<1x128xi32>
    %89 = arith.sitofp %88 : vector<1x128xi32> to vector<1x128xf32>
    %90 = arith.mulf %76, %89 : vector<1x128xf32>
    %cst_26 = arith.constant dense<0.000000e+00> : vector<1xf32>
    %91 = vector.multi_reduction <add>, %90, %cst_26 [1] : vector<1x128xf32> to vector<1xf32>
    %92 = vector.shape_cast %91 : vector<1xf32> to vector<1x1xf32>
    %cst_27 = arith.constant 4.000000e+00 : f32
    %93 = vector.broadcast %cst_27 : f32 to vector<1x1xf32>
    %94 = arith.divf %92, %93 : vector<1x1xf32>
    %95 = vector.broadcast %94 : vector<1x1xf32> to vector<1x128xf32>
    %96 = arith.subf %95, %76 : vector<1x128xf32>
    %97 = math.exp %96 : vector<1x128xf32>
    %cst_28 = arith.constant 1.000000e+00 : f32
    %98 = vector.broadcast %cst_28 : f32 to vector<1x128xf32>
    %99 = arith.addf %98, %97 : vector<1x128xf32>
    %100 = math.log %99 : vector<1x128xf32>
    %101 = arith.mulf %100, %82 : vector<1x128xf32>
    %cst_29 = arith.constant dense<0.000000e+00> : vector<1xf32>
    %102 = vector.multi_reduction <add>, %101, %cst_29 [1] : vector<1x128xf32> to vector<1xf32>
    %103 = vector.shape_cast %102 : vector<1xf32> to vector<1x1xf32>
    %cst_30 = arith.constant 4.000000e+00 : f32
    %104 = vector.broadcast %cst_30 : f32 to vector<1x1xf32>
    %105 = arith.divf %103, %104 : vector<1x1xf32>
    %c0_31 = arith.constant 0 : index
    %c0_32 = arith.constant 0 : index
    %106 = vector.load %arg4[%c0_31, %c0_32] : memref<1x1xf32, #tpu.memory_space<vmem>>, vector<1x1xf32>
    tpu.vector_store %arg4[%c0_31, %c0_32], %105 {strides = array<i32>} : memref<1x1xf32, #tpu.memory_space<vmem>>, vector<1x1xf32>,
    return
  }
}

</mosaic_0001>

<llo_original>
// kernel: hnepy_forward_pallas.1
$region0: #{hnepy_forward_pallas.1}
  #allocation0 [shape = 'u32[]', space=smem, size = 0x4, offset = 0x4, fixed_abs, tag = 'smem constant byte address 0x4 - core index']
  #allocation1 [shape = 'u32[144,128]{1,0:T(1,128)}', space=vmem, size = 0x12000, scoped, tag = 'internal scratch']
  %s0 = inlined_call_operand.vmem [shape: f32[39,24], index: 0, kind: input, shape index: {}]
  %s1 = inlined_call_operand.vmem [shape: f32[24,24], index: 1, kind: input, shape index: {}]
  %s2 = inlined_call_operand.hbm [shape: f32[72,128], index: 2, kind: input, shape index: {}]
  %s3 = inlined_call_operand.hbm [shape: f32[24,1024], index: 3, kind: input, shape index: {}]
  %s4 = inlined_call_operand.hbm [shape: f32[1,1], index: 4, kind: output, shape index: {0}]
  %s5 = inlined_call_operand.vmem [shape: f32[1,128], index: 5, kind: output, shape index: {1}]
  %6 = xla_tuple %s4, %s5
  %s7 = sld [smem:[#allocation0]]
  $region42: #{hnepy_forward_pallas.1} parent=0
    _
  %s9 = ssub.s32 1, %s7
  %s10 = scalar_select 0, %s9, %s7
  $region1: #{hnepy_forward_pallas.1} parent=0
    #allocation2 [shape = 'u8[36864]{0}', space=vmem, size = 0x9000, scoped, tag = 'input window, operand 2, single buffered']
    #allocation3 [shape = 's32[1]{0}', space=sflag, size = 0x4, scoped, tag = 'scoped memory for hnepy_forward_pallas.1']
    #allocation4 [shape = 's32[1]{0}', space=sflag, size = 0x4, scoped, tag = 'scoped memory for hnepy_forward_pallas.1']
    #allocation5 [shape = 'u8[98304]{0}', space=vmem, size = 0x18000, scoped, tag = 'input window, operand 3, single buffered']
    #allocation6 [shape = 's32[1]{0}', space=sflag, size = 0x4, scoped, tag = 'scoped memory for hnepy_forward_pallas.1']
    #allocation7 [shape = 'u8[512]{0}', space=vmem, size = 0x400, scoped, tag = 'output window, operand 0, single buffered']
    %11 = vsyncpa [#allocation3], 0
    %12 = vsyncpa [#allocation6], 0
    %13 = vsyncpa [#allocation4], 0
    // Predicated region
    $region2: #{hnepy_forward_pallas.1} parent=1 // pred_check
      _
    $region3: #{hnepy_forward_pallas.1} parent=1 // pred_check_branch
      %15 = sbr.rel (0) target = $region5
    $region4: #{hnepy_forward_pallas.1} parent=1 // pred_region
      _
    $region5: #{hnepy_forward_pallas.1} parent=1 // pred_fallthru
      _
    // Predicated region
    $region6: #{hnepy_forward_pallas.1} parent=1 // pred_check
      _
    $region7: #{hnepy_forward_pallas.1} parent=1 // pred_check_branch
      %17 = sbr.rel (0) target = $region9
    $region8: #{hnepy_forward_pallas.1} parent=1 // pred_region
      _
    $region9: #{hnepy_forward_pallas.1} parent=1 // pred_fallthru
      _
    // Predicated region
    $region10: #{hnepy_forward_pallas.1} parent=1 // pred_check
      _
    $region11: #{hnepy_forward_pallas.1} parent=1 // pred_check_branch
      %19 = sbr.rel (0) target = $region13
    $region12: #{hnepy_forward_pallas.1} parent=1 // pred_region
      %s21 = ssub.s32 1152, 1152
      %22 = vsyncadd [#allocation3], %s21
      %s23 = sshll.u32 [#allocation2], 4
      %s24 = int_to_ptr.vmem [resolvable:$true] %s23
      %29 = dma.hbm_to_vmem [thread:$0]  %s2, 1152, %s24, [#allocation3], 128, 128, 8
    $region13: #{hnepy_forward_pallas.1} parent=1 // pred_fallthru
      _
    // Predicated region
    $region14: #{hnepy_forward_pallas.1} parent=1 // pred_check
      _
    $region15: #{hnepy_forward_pallas.1} parent=1 // pred_check_branch
      %31 = sbr.rel (0) target = $region17
    $region16: #{hnepy_forward_pallas.1} parent=1 // pred_region
      %s33 = ssub.s32 3072, 3072
      %34 = vsyncadd [#allocation6], %s33
      %s35 = sshll.u32 [#allocation5], 4
      %s36 = int_to_ptr.vmem [resolvable:$true] %s35
      %41 = dma.hbm_to_vmem [thread:$0]  %s3, 3072, %s36, [#allocation6], 1024, 1024, 64
    $region17: #{hnepy_forward_pallas.1} parent=1 // pred_fallthru
      _
    // Predicated region
    $region18: #{hnepy_forward_pallas.1} parent=1 // pred_check
      _
    $region19: #{hnepy_forward_pallas.1} parent=1 // pred_check_branch
      %43 = sbr.rel (0) target = $region21
    $region20: #{hnepy_forward_pallas.1} parent=1 // pred_region
      %44 = dma.done [#allocation3], 1152
    $region21: #{hnepy_forward_pallas.1} parent=1 // pred_fallthru
      _
    // Predicated region
    $region22: #{hnepy_forward_pallas.1} parent=1 // pred_check
      _
    $region23: #{hnepy_forward_pallas.1} parent=1 // pred_check_branch
      %46 = sbr.rel (0) target = $region25
    $region24: #{hnepy_forward_pallas.1} parent=1 // pred_region
      %47 = dma.done [#allocation6], 3072
    $region25: #{hnepy_forward_pallas.1} parent=1 // pred_fallthru
      _
    %v48 = vld [vmem:[#allocation2] sm:$0xff]
    %v49 = vld [vmem:[#allocation2 + $0x8] sm:$0xff]
    %v50 = vld [vmem:[#allocation2 + $0x10] sm:$0xff]
    %v51 = vld [vmem:[#allocation2 + $0x18] sm:$0xff]
    %v52 = vld [vmem:[#allocation2 + $0x20] sm:$0xff]
    %v53 = vld [vmem:[#allocation2 + $0x28] sm:$0xff]
    %v54 = vld [vmem:[#allocation2 + $0x30] sm:$0xff]
    %v55 = vld [vmem:[#allocation2 + $0x38] sm:$0xff]
    %v56 = vld [vmem:[#allocation2 + $0x40] sm:$0x7]
    %v57 = vld [vmem:[%s0] sm:$0xff]
    %v58 = vld [vmem:[%s0 + $0x8] sm:$0xff]
    %v59 = vld [vmem:[%s0 + $0x10] sm:$0xff]
    %v60 = vld [vmem:[%s0 + $0x18] sm:$0xff]
    %v61 = vld [vmem:[%s0 + $0x20] sm:$0x7f]
    %vm62 = vcmask 318464
    %v64 = vsel %vm62, %v48, 0
    %v67 = vsel %vm62, %v49, 0
    %vm69 = vcmask 1046528
    %v71 = vsel %vm69, %v61, 0
    %73 = vmatprep.subr.mxu0 0.0
    %74 = vmatpush1.msra.mxu0 %v57
    %75 = vmatprep.subr.mxu0 0.0
    %76 = vmatpush1.msra.mxu0 %v58
    %77 = vmatprep.subr.mxu0 0.0
    %78 = vmatpush1.msra.mxu0 %v59
    %79 = vmatprep.subr.mxu0 0.0
    %80 = vmatpush1.msra.mxu0 %v60
    %81 = vmatprep.subr.mxu0 0.0
    %82 = vmatpush1.msra.mxu0 %v71
    %83 = vmatprep.subr.mxu0 0.0
    %84 = vmatpush1.msra.mxu0 0.0
    %85 = vmatprep.subr.mxu0 0.0
    %86 = vmatpush1.msra.mxu0 0.0
    %87 = vmatprep.subr.mxu0 0.0
    %88 = vmatpush1.msra.mxu0 0.0
    %89 = vmatprep.subr.mxu0 0.0
    %90 = vmatpush1.msra.mxu0 0.0
    %91 = vmatprep.subr.mxu0 0.0
    %92 = vmatpush1.msra.mxu0 0.0
    %93 = vmatprep.subr.mxu0 0.0
    %94 = vmatpush1.msra.mxu0 0.0
    %95 = vmatprep.subr.mxu0 0.0
    %96 = vmatpush1.msra.mxu0 0.0
    %97 = vmatprep.subr.mxu0 0.0
    %98 = vmatpush1.msra.mxu0 0.0
    %99 = vmatprep.subr.mxu0 0.0
    %100 = vmatpush1.msra.mxu0 0.0
    %101 = vmatprep.subr.mxu0 0.0
    %102 = vmatpush1.msra.mxu0 0.0
    %103 = vmatprep.subr.mxu0 0.0
    %104 = vmatpush1.msra.mxu0 0.0
    %105 = vmatprep.subr.mxu0 0.0
    %106 = vmatpush1.msra.mxu0 0.0
    %107 = vmatprep.subr.mxu0 0.0
    %108 = vmatpush1.msra.mxu0 0.0
    %109 = vmatprep.subr.mxu0 0.0
    %110 = vmatpush1.msra.mxu0 0.0
    %111 = vmatprep.subr.mxu0 0.0
    %112 = vmatpush1.msra.mxu0 0.0
    %113 = vmatprep.subr.mxu0 0.0
    %114 = vmatpush1.msra.mxu0 0.0
    %115 = vmatprep.subr.mxu0 0.0
    %116 = vmatpush1.msra.mxu0 0.0
    %117 = vmatprep.subr.mxu0 0.0
    %118 = vmatpush1.msra.mxu0 0.0
    %119 = vmatprep.subr.mxu0 0.0
    %120 = vmatpush1.msra.mxu0 0.0
    %121 = vmatprep.subr.mxu0 0.0
    %122 = vmatpush1.msra.mxu0 0.0
    %123 = vmatprep.subr.mxu0 0.0
    %124 = vmatpush1.msra.mxu0 0.0
    %125 = vmatprep.subr.mxu0 0.0
    %126 = vmatpush1.msra.mxu0 0.0
    %127 = vmatprep.subr.mxu0 0.0
    %128 = vmatpush1.msra.mxu0 0.0
    %129 = vmatprep.subr.mxu0 0.0
    %130 = vmatpush1.msra.mxu0 0.0
    %131 = vmatprep.subr.mxu0 0.0
    %132 = vmatpush1.msra.mxu0 0.0
    %133 = vmatprep.subr.mxu0 0.0
    %134 = vmatpush1.msra.mxu0 0.0
    %135 = vmatprep.subr.mxu0 0.0
    %136 = vmatpush1.msra.mxu0 0.0
    %137 = vmatprep.mubr.f32.mxu0 0.0
    %138 = vmatmul.mubr.f32.gmra.mrb[0].mxu0 %v64
    %v139 = vpop.f32.mrb[0].mxu0
    %v140 = vadd.f32 0.0, %v139
    %v141 = vpop.f32.mrb[0].mxu0
    %142 = vmatprep.mubr.f32.mxu0 0.0
    %143 = vmatmul.mubr.f32.gmra.mrb[0].mxu0 %v67
    %v144 = vpop.f32.mrb[0].mxu0
    %v145 = vadd.f32 0.0, %v144
    %v146 = vpop.f32.mrb[0].mxu0
    %147 = vdwg.mxu0
    %v148 = vtanh.pop %v140
    %v149 = vtanh.pop %v145
    %v150 = vld [vmem:[%s1] sm:$0xff]
    %v151 = vld [vmem:[%s1 + $0x8] sm:$0xff]
    %v152 = vld [vmem:[%s1 + $0x10] sm:$0xff]
    %vm153 = vcmask 195584
    %v155 = vsel %vm153, %v148, 0
    %v158 = vsel %vm153, %v149, 0
    %160 = vmatprep.subr.mxu0 0.0
    %161 = vmatpush1.msra.mxu0 %v150
    %162 = vmatprep.subr.mxu0 0.0
    %163 = vmatpush1.msra.mxu0 %v151
    %164 = vmatprep.subr.mxu0 0.0
    %165 = vmatpush1.msra.mxu0 %v152
    %166 = vmatprep.subr.mxu0 0.0
    %167 = vmatpush1.msra.mxu0 0.0
    %168 = vmatprep.subr.mxu0 0.0
    %169 = vmatpush1.msra.mxu0 0.0
    %170 = vmatprep.subr.mxu0 0.0
    %171 = vmatpush1.msra.mxu0 0.0
    %172 = vmatprep.subr.mxu0 0.0
    %173 = vmatpush1.msra.mxu0 0.0
    %174 = vmatprep.subr.mxu0 0.0
    %175 = vmatpush1.msra.mxu0 0.0
    %176 = vmatprep.subr.mxu0 0.0
    %177 = vmatpush1.msra.mxu0 0.0
    %178 = vmatprep.subr.mxu0 0.0
    %179 = vmatpush1.msra.mxu0 0.0
    %180 = vmatprep.subr.mxu0 0.0
    %181 = vmatpush1.msra.mxu0 0.0
    %182 = vmatprep.subr.mxu0 0.0
    %183 = vmatpush1.msra.mxu0 0.0
    %184 = vmatprep.subr.mxu0 0.0
    %185 = vmatpush1.msra.mxu0 0.0
    %186 = vmatprep.subr.mxu0 0.0
    %187 = vmatpush1.msra.mxu0 0.0
    %188 = vmatprep.subr.mxu0 0.0
    %189 = vmatpush1.msra.mxu0 0.0
    %190 = vmatprep.subr.mxu0 0.0
    %191 = vmatpush1.msra.mxu0 0.0
    %192 = vmatprep.subr.mxu0 0.0
    %193 = vmatpush1.msra.mxu0 0.0
    %194 = vmatprep.subr.mxu0 0.0
    %195 = vmatpush1.msra.mxu0 0.0
    %196 = vmatprep.subr.mxu0 0.0
    %197 = vmatpush1.msra.mxu0 0.0
    %198 = vmatprep.subr.mxu0 0.0
    %199 = vmatpush1.msra.mxu0 0.0
    %200 = vmatprep.subr.mxu0 0.0
    %201 = vmatpush1.msra.mxu0 0.0
    %202 = vmatprep.subr.mxu0 0.0
    %203 = vmatpush1.msra.mxu0 0.0
    %204 = vmatprep.subr.mxu0 0.0
    %205 = vmatpush1.msra.mxu0 0.0
    %206 = vmatprep.subr.mxu0 0.0
    %207 = vmatpush1.msra.mxu0 0.0
    %208 = vmatprep.subr.mxu0 0.0
    %209 = vmatpush1.msra.mxu0 0.0
    %210 = vmatprep.subr.mxu0 0.0
    %211 = vmatpush1.msra.mxu0 0.0
    %212 = vmatprep.subr.mxu0 0.0
    %213 = vmatpush1.msra.mxu0 0.0
    %214 = vmatprep.subr.mxu0 0.0
    %215 = vmatpush1.msra.mxu0 0.0
    %216 = vmatprep.subr.mxu0 0.0
    %217 = vmatpush1.msra.mxu0 0.0
    %218 = vmatprep.subr.mxu0 0.0
    %219 = vmatpush1.msra.mxu0 0.0
    %220 = vmatprep.subr.mxu0 0.0
    %221 = vmatpush1.msra.mxu0 0.0
    %222 = vmatprep.subr.mxu0 0.0
    %223 = vmatpush1.msra.mxu0 0.0
    %224 = vmatprep.mubr.f32.mxu0 0.0
    %225 = vmatmul.mubr.f32.gmra.mrb[0].mxu0 %v155
    %v226 = vpop.f32.mrb[0].mxu0
    %v227 = vadd.f32 0.0, %v226
    %v228 = vpop.f32.mrb[0].mxu0
    %229 = vmatprep.mubr.f32.mxu0 0.0
    %230 = vmatmul.mubr.f32.gmra.mrb[0].mxu0 %v158
    %v231 = vpop.f32.mrb[0].mxu0
    %v232 = vadd.f32 0.0, %v231
    %v233 = vpop.f32.mrb[0].mxu0
    %234 = vdwg.mxu0
    %236 = vset.pattern.permute.xlu0 16
    %237 = vperm.xlu0 %236, %v50
    %v238 = vpop.permute.xlu0 %237
    %241 = vset.pattern.permute.xlu0 16
    %242 = vperm.xlu0 %241, %v51
    %v243 = vpop.permute.xlu0 %242
    %vm245 = vcmask 130048
    %v246 = vsel %vm245, %v50, 0
    %v248 = vsel %vm245, %v51, 0
    %250 = vmatprep.subr.mxu0 0.0
    %251 = vmatpush1.msra.mxu0 %v227
    %252 = vmatprep.subr.mxu0 0.0
    %253 = vmatpush1.msra.mxu0 %v232
    %254 = vmatprep.subr.mxu0 0.0
    %255 = vmatpush1.msra.mxu0 0.0
    %256 = vmatprep.subr.mxu0 0.0
    %257 = vmatpush1.msra.mxu0 0.0
    %258 = vmatprep.subr.mxu0 0.0
    %259 = vmatpush1.msra.mxu0 0.0
    %260 = vmatprep.subr.mxu0 0.0
    %261 = vmatpush1.msra.mxu0 0.0
    %262 = vmatprep.subr.mxu0 0.0
    %263 = vmatpush1.msra.mxu0 0.0
    %264 = vmatprep.subr.mxu0 0.0
    %265 = vmatpush1.msra.mxu0 0.0
    %266 = vmatprep.subr.mxu0 0.0
    %267 = vmatpush1.msra.mxu0 0.0
    %268 = vmatprep.subr.mxu0 0.0
    %269 = vmatpush1.msra.mxu0 0.0
    %270 = vmatprep.subr.mxu0 0.0
    %271 = vmatpush1.msra.mxu0 0.0
    %272 = vmatprep.subr.mxu0 0.0
    %273 = vmatpush1.msra.mxu0 0.0
    %274 = vmatprep.subr.mxu0 0.0
    %275 = vmatpush1.msra.mxu0 0.0
    %276 = vmatprep.subr.mxu0 0.0
    %277 = vmatpush1.msra.mxu0 0.0
    %278 = vmatprep.subr.mxu0 0.0
    %279 = vmatpush1.msra.mxu0 0.0
    %280 = vmatprep.subr.mxu0 0.0
    %281 = vmatpush1.msra.mxu0 0.0
    %282 = vmatprep.subr.mxu0 0.0
    %283 = vmatpush1.msra.mxu0 0.0
    %284 = vmatprep.subr.mxu0 0.0
    %285 = vmatpush1.msra.mxu0 0.0
    %286 = vmatprep.subr.mxu0 0.0
    %287 = vmatpush1.msra.mxu0 0.0
    %288 = vmatprep.subr.mxu0 0.0
    %289 = vmatpush1.msra.mxu0 0.0
    %290 = vmatprep.subr.mxu0 0.0
    %291 = vmatpush1.msra.mxu0 0.0
    %292 = vmatprep.subr.mxu0 0.0
    %293 = vmatpush1.msra.mxu0 0.0
    %294 = vmatprep.subr.mxu0 0.0
    %295 = vmatpush1.msra.mxu0 0.0
    %296 = vmatprep.subr.mxu0 0.0
    %297 = vmatpush1.msra.mxu0 0.0
    %298 = vmatprep.subr.mxu0 0.0
    %299 = vmatpush1.msra.mxu0 0.0
    %300 = vmatprep.subr.mxu0 0.0
    %301 = vmatpush1.msra.mxu0 0.0
    %302 = vmatprep.subr.mxu0 0.0
    %303 = vmatpush1.msra.mxu0 0.0
    %304 = vmatprep.subr.mxu0 0.0
    %305 = vmatpush1.msra.mxu0 0.0
    %306 = vmatprep.subr.mxu0 0.0
    %307 = vmatpush1.msra.mxu0 0.0
    %308 = vmatprep.subr.mxu0 0.0
    %309 = vmatpush1.msra.mxu0 0.0
    %310 = vmatprep.subr.mxu0 0.0
    %311 = vmatpush1.msra.mxu0 0.0
    %312 = vmatprep.subr.mxu0 0.0
    %313 = vmatpush1.msra.mxu0 0.0
    %314 = vmatprep.mubr.f32.mxu0 0.0
    %315 = vmatmul.mubr.f32.gmra.mrb[0].mxu0 %v246
    %v316 = vpop.f32.mrb[0].mxu0
    %v317 = vadd.f32 %v238, %v316
    %v318 = vpop.f32.mrb[0].mxu0
    %319 = vmatprep.mubr.f32.mxu0 0.0
    %320 = vmatmul.mubr.f32.gmra.mrb[0].mxu0 %v248
    %v321 = vpop.f32.mrb[0].mxu0
    %v322 = vadd.f32 %v243, %v321
    %v323 = vpop.f32.mrb[0].mxu0
    %324 = vdwg.mxu0
    %v325 = vtanh.pop %v317
    %v326 = vtanh.pop %v322
    %328 = vset.pattern.permute.xlu0 16
    %329 = vperm.xlu0 %328, %v52
    %v330 = vpop.permute.xlu0 %329
    %v332 = vsel %vm245, %v52, 0
    %334 = vmatprep.subr.mxu0 0.0
    %335 = vmatpush1.msra.mxu0 %v325
    %336 = vmatprep.subr.mxu0 0.0
    %337 = vmatpush1.msra.mxu0 %v326
    %338 = vmatprep.subr.mxu0 0.0
    %339 = vmatpush1.msra.mxu0 0.0
    %340 = vmatprep.subr.mxu0 0.0
    %341 = vmatpush1.msra.mxu0 0.0
    %342 = vmatprep.subr.mxu0 0.0
    %343 = vmatpush1.msra.mxu0 0.0
    %344 = vmatprep.subr.mxu0 0.0
    %345 = vmatpush1.msra.mxu0 0.0
    %346 = vmatprep.subr.mxu0 0.0
    %347 = vmatpush1.msra.mxu0 0.0
    %348 = vmatprep.subr.mxu0 0.0
    %349 = vmatpush1.msra.mxu0 0.0
    %350 = vmatprep.subr.mxu0 0.0
    %351 = vmatpush1.msra.mxu0 0.0
    %352 = vmatprep.subr.mxu0 0.0
    %353 = vmatpush1.msra.mxu0 0.0
    %354 = vmatprep.subr.mxu0 0.0
    %355 = vmatpush1.msra.mxu0 0.0
    %356 = vmatprep.subr.mxu0 0.0
    %357 = vmatpush1.msra.mxu0 0.0
    %358 = vmatprep.subr.mxu0 0.0
    %359 = vmatpush1.msra.mxu0 0.0
    %360 = vmatprep.subr.mxu0 0.0
    %361 = vmatpush1.msra.mxu0 0.0
    %362 = vmatprep.subr.mxu0 0.0
    %363 = vmatpush1.msra.mxu0 0.0
    %364 = vmatprep.subr.mxu0 0.0
    %365 = vmatpush1.msra.mxu0 0.0
    %366 = vmatprep.subr.mxu0 0.0
    %367 = vmatpush1.msra.mxu0 0.0
    %368 = vmatprep.subr.mxu0 0.0
    %369 = vmatpush1.msra.mxu0 0.0
    %370 = vmatprep.subr.mxu0 0.0
    %371 = vmatpush1.msra.mxu0 0.0
    %372 = vmatprep.subr.mxu0 0.0
    %373 = vmatpush1.msra.mxu0 0.0
    %374 = vmatprep.subr.mxu0 0.0
    %375 = vmatpush1.msra.mxu0 0.0
    %376 = vmatprep.subr.mxu0 0.0
    %377 = vmatpush1.msra.mxu0 0.0
    %378 = vmatprep.subr.mxu0 0.0
    %379 = vmatpush1.msra.mxu0 0.0
    %380 = vmatprep.subr.mxu0 0.0
    %381 = vmatpush1.msra.mxu0 0.0
    %382 = vmatprep.subr.mxu0 0.0
    %383 = vmatpush1.msra.mxu0 0.0
    %384 = vmatprep.subr.mxu0 0.0
    %385 = vmatpush1.msra.mxu0 0.0
    %386 = vmatprep.subr.mxu0 0.0
    %387 = vmatpush1.msra.mxu0 0.0
    %388 = vmatprep.subr.mxu0 0.0
    %389 = vmatpush1.msra.mxu0 0.0
    %390 = vmatprep.subr.mxu0 0.0
    %391 = vmatpush1.msra.mxu0 0.0
    %392 = vmatprep.subr.mxu0 0.0
    %393 = vmatpush1.msra.mxu0 0.0
    %394 = vmatprep.subr.mxu0 0.0
    %395 = vmatpush1.msra.mxu0 0.0
    %396 = vmatprep.subr.mxu0 0.0
    %397 = vmatpush1.msra.mxu0 0.0
    %398 = vmatprep.mubr.f32.mxu0 0.0
    %399 = vmatmul.mubr.f32.gmra.mrb[0].mxu0 %v332
    %v400 = vpop.f32.mrb[0].mxu0
    %v401 = vadd.f32 %v330, %v400
    %v402 = vpop.f32.mrb[0].mxu0
    %403 = vdwg.mxu0
    %v404 = vld [vmem:[#allocation5] sm:$0xff]
    %v405 = vld [vmem:[#allocation5 + $0x8] sm:$0xff]
    %v406 = vld [vmem:[#allocation5 + $0x10] sm:$0xff]
    %v407 = vld [vmem:[#allocation5 + $0x18] sm:$0xff]
    %v408 = vld [vmem:[#allocation5 + $0x20] sm:$0xff]
    %v409 = vld [vmem:[#allocation5 + $0x28] sm:$0xff]
    %v410 = vld [vmem:[#allocation5 + $0x30] sm:$0xff]
    %v411 = vld [vmem:[#allocation5 + $0x38] sm:$0xff]
    %v412 = vld [vmem:[#allocation5 + $0x40] sm:$0xff]
    %v413 = vld [vmem:[#allocation5 + $0x48] sm:$0xff]
    %v414 = vld [vmem:[#allocation5 + $0x50] sm:$0xff]
    %v415 = vld [vmem:[#allocation5 + $0x58] sm:$0xff]
    %v416 = vld [vmem:[#allocation5 + $0x60] sm:$0xff]
    %v417 = vld [vmem:[#allocation5 + $0x68] sm:$0xff]
    %v418 = vld [vmem:[#allocation5 + $0x70] sm:$0xff]
    %v419 = vld [vmem:[#allocation5 + $0x78] sm:$0xff]
    %v420 = vld [vmem:[#allocation5 + $0x80] sm:$0xff]
    %v421 = vld [vmem:[#allocation5 + $0x88] sm:$0xff]
    %v422 = vld [vmem:[#allocation5 + $0x90] sm:$0xff]
    %v423 = vld [vmem:[#allocation5 + $0x98] sm:$0xff]
    %v424 = vld [vmem:[#allocation5 + $0xa0] sm:$0xff]
    %v425 = vld [vmem:[#allocation5 + $0xa8] sm:$0xff]
    %v426 = vld [vmem:[#allocation5 + $0xb0] sm:$0xff]
    %v427 = vld [vmem:[#allocation5 + $0xb8] sm:$0xff]
    %v429 = vsel %vm153, %v401, 0
    %431 = vmatprep.subr.mxu0 %v405
    %432 = vmatpush1.msra.mxu0 %v404
    %433 = vmatprep.subr.mxu0 %v413
    %434 = vmatpush1.msra.mxu0 %v412
    %435 = vmatprep.subr.mxu0 %v421
    %436 = vmatpush1.msra.mxu0 %v420
    %437 = vmatprep.subr.mxu0 0.0
    %438 = vmatpush1.msra.mxu0 0.0
    %439 = vmatprep.subr.mxu0 0.0
    %440 = vmatpush1.msra.mxu0 0.0
    %441 = vmatprep.subr.mxu0 0.0
    %442 = vmatpush1.msra.mxu0 0.0
    %443 = vmatprep.subr.mxu0 0.0
    %444 = vmatpush1.msra.mxu0 0.0
    %445 = vmatprep.subr.mxu0 0.0
    %446 = vmatpush1.msra.mxu0 0.0
    %447 = vmatprep.subr.mxu0 0.0
    %448 = vmatpush1.msra.mxu0 0.0
    %449 = vmatprep.subr.mxu0 0.0
    %450 = vmatpush1.msra.mxu0 0.0
    %451 = vmatprep.subr.mxu0 0.0
    %452 = vmatpush1.msra.mxu0 0.0
    %453 = vmatprep.subr.mxu0 0.0
    %454 = vmatpush1.msra.mxu0 0.0
    %455 = vmatprep.subr.mxu0 0.0
    %456 = vmatpush1.msra.mxu0 0.0
    %457 = vmatprep.subr.mxu0 0.0
    %458 = vmatpush1.msra.mxu0 0.0
    %459 = vmatprep.subr.mxu0 0.0
    %460 = vmatpush1.msra.mxu0 0.0
    %461 = vmatprep.subr.mxu0 0.0
    %462 = vmatpush1.msra.mxu0 0.0
    %463 = vmatprep.subr.mxu0 0.0
    %464 = vmatpush1.msra.mxu0 0.0
    %465 = vmatprep.subr.mxu0 0.0
    %466 = vmatpush1.msra.mxu0 0.0
    %467 = vmatprep.subr.mxu0 0.0
    %468 = vmatpush1.msra.mxu0 0.0
    %469 = vmatprep.subr.mxu0 0.0
    %470 = vmatpush1.msra.mxu0 0.0
    %471 = vmatprep.subr.mxu0 0.0
    %472 = vmatpush1.msra.mxu0 0.0
    %473 = vmatprep.subr.mxu0 0.0
    %474 = vmatpush1.msra.mxu0 0.0
    %475 = vmatprep.subr.mxu0 0.0
    %476 = vmatpush1.msra.mxu0 0.0
    %477 = vmatprep.subr.mxu0 0.0
    %478 = vmatpush1.msra.mxu0 0.0
    %479 = vmatprep.subr.mxu0 0.0
    %480 = vmatpush1.msra.mxu0 0.0
    %481 = vmatprep.subr.mxu0 0.0
    %482 = vmatpush1.msra.mxu0 0.0
    %483 = vmatprep.subr.mxu0 0.0
    %484 = vmatpush1.msra.mxu0 0.0
    %485 = vmatprep.subr.mxu0 0.0
    %486 = vmatpush1.msra.mxu0 0.0
    %487 = vmatprep.subr.mxu0 0.0
    %488 = vmatpush1.msra.mxu0 0.0
    %489 = vmatprep.subr.mxu0 0.0
    %490 = vmatpush1.msra.mxu0 0.0
    %491 = vmatprep.subr.mxu0 0.0
    %492 = vmatpush1.msra.mxu0 0.0
    %493 = vmatprep.subr.mxu0 0.0
    %494 = vmatpush1.msra.mxu0 0.0
    %495 = vmatprep.mubr.f32.mxu0 0.0
    %496 = vmatmul.mubr.f32.gmra.mrb[0].mxu0 %v429
    %v497 = vpop.f32.mrb[0].mxu0
    %v498 = vadd.f32 0.0, %v497
    %v499 = vpop.f32.mrb[0].mxu0
    %v500 = vadd.f32 0.0, %v499
    %501 = vdwg.mxu0
    %502 = vmatprep.subr.mxu0 %v407
    %503 = vmatpush1.msra.mxu0 %v406
    %504 = vmatprep.subr.mxu0 %v415
    %505 = vmatpush1.msra.mxu0 %v414
    %506 = vmatprep.subr.mxu0 %v423
    %507 = vmatpush1.msra.mxu0 %v422
    %508 = vmatprep.subr.mxu0 0.0
    %509 = vmatpush1.msra.mxu0 0.0
    %510 = vmatprep.subr.mxu0 0.0
    %511 = vmatpush1.msra.mxu0 0.0
    %512 = vmatprep.subr.mxu0 0.0
    %513 = vmatpush1.msra.mxu0 0.0
    %514 = vmatprep.subr.mxu0 0.0
    %515 = vmatpush1.msra.mxu0 0.0
    %516 = vmatprep.subr.mxu0 0.0
    %517 = vmatpush1.msra.mxu0 0.0
    %518 = vmatprep.subr.mxu0 0.0
    %519 = vmatpush1.msra.mxu0 0.0
    %520 = vmatprep.subr.mxu0 0.0
    %521 = vmatpush1.msra.mxu0 0.0
    %522 = vmatprep.subr.mxu0 0.0
    %523 = vmatpush1.msra.mxu0 0.0
    %524 = vmatprep.subr.mxu0 0.0
    %525 = vmatpush1.msra.mxu0 0.0
    %526 = vmatprep.subr.mxu0 0.0
    %527 = vmatpush1.msra.mxu0 0.0
    %528 = vmatprep.subr.mxu0 0.0
    %529 = vmatpush1.msra.mxu0 0.0
    %530 = vmatprep.subr.mxu0 0.0
    %531 = vmatpush1.msra.mxu0 0.0
    %532 = vmatprep.subr.mxu0 0.0
    %533 = vmatpush1.msra.mxu0 0.0
    %534 = vmatprep.subr.mxu0 0.0
    %535 = vmatpush1.msra.mxu0 0.0
    %536 = vmatprep.subr.mxu0 0.0
    %537 = vmatpush1.msra.mxu0 0.0
    %538 = vmatprep.subr.mxu0 0.0
    %539 = vmatpush1.msra.mxu0 0.0
    %540 = vmatprep.subr.mxu0 0.0
    %541 = vmatpush1.msra.mxu0 0.0
    %542 = vmatprep.subr.mxu0 0.0
    %543 = vmatpush1.msra.mxu0 0.0
    %544 = vmatprep.subr.mxu0 0.0
    %545 = vmatpush1.msra.mxu0 0.0
    %546 = vmatprep.subr.mxu0 0.0
    %547 = vmatpush1.msra.mxu0 0.0
    %548 = vmatprep.subr.mxu0 0.0
    %549 = vmatpush1.msra.mxu0 0.0
    %550 = vmatprep.subr.mxu0 0.0
    %551 = vmatpush1.msra.mxu0 0.0
    %552 = vmatprep.subr.mxu0 0.0
    %553 = vmatpush1.msra.mxu0 0.0
    %554 = vmatprep.subr.mxu0 0.0
    %555 = vmatpush1.msra.mxu0 0.0
    %556 = vmatprep.subr.mxu0 0.0
    %557 = vmatpush1.msra.mxu0 0.0
    %558 = vmatprep.subr.mxu0 0.0
    %559 = vmatpush1.msra.mxu0 0.0
    %560 = vmatprep.subr.mxu0 0.0
    %561 = vmatpush1.msra.mxu0 0.0
    %562 = vmatprep.subr.mxu0 0.0
    %563 = vmatpush1.msra.mxu0 0.0
    %564 = vmatprep.subr.mxu0 0.0
    %565 = vmatpush1.msra.mxu0 0.0
    %566 = vmatprep.mubr.f32.mxu0 0.0
    %567 = vmatmul.mubr.f32.gmra.mrb[0].mxu0 %v429
    %v568 = vpop.f32.mrb[0].mxu0
    %v569 = vadd.f32 0.0, %v568
    %v570 = vpop.f32.mrb[0].mxu0
    %v571 = vadd.f32 0.0, %v570
    %572 = vdwg.mxu0
    %573 = vmatprep.subr.mxu0 %v409
    %574 = vmatpush1.msra.mxu0 %v408
    %575 = vmatprep.subr.mxu0 %v417
    %576 = vmatpush1.msra.mxu0 %v416
    %577 = vmatprep.subr.mxu0 %v425
    %578 = vmatpush1.msra.mxu0 %v424
    %579 = vmatprep.subr.mxu0 0.0
    %580 = vmatpush1.msra.mxu0 0.0
    %581 = vmatprep.subr.mxu0 0.0
    %582 = vmatpush1.msra.mxu0 0.0
    %583 = vmatprep.subr.mxu0 0.0
    %584 = vmatpush1.msra.mxu0 0.0
    %585 = vmatprep.subr.mxu0 0.0
    %586 = vmatpush1.msra.mxu0 0.0
    %587 = vmatprep.subr.mxu0 0.0
    %588 = vmatpush1.msra.mxu0 0.0
    %589 = vmatprep.subr.mxu0 0.0
    %590 = vmatpush1.msra.mxu0 0.0
    %591 = vmatprep.subr.mxu0 0.0
    %592 = vmatpush1.msra.mxu0 0.0
    %593 = vmatprep.subr.mxu0 0.0
    %594 = vmatpush1.msra.mxu0 0.0
    %595 = vmatprep.subr.mxu0 0.0
    %596 = vmatpush1.msra.mxu0 0.0
    %597 = vmatprep.subr.mxu0 0.0
    %598 = vmatpush1.msra.mxu0 0.0
    %599 = vmatprep.subr.mxu0 0.0
    %600 = vmatpush1.msra.mxu0 0.0
    %601 = vmatprep.subr.mxu0 0.0
    %602 = vmatpush1.msra.mxu0 0.0
    %603 = vmatprep.subr.mxu0 0.0
    %604 = vmatpush1.msra.mxu0 0.0
    %605 = vmatprep.subr.mxu0 0.0
    %606 = vmatpush1.msra.mxu0 0.0
    %607 = vmatprep.subr.mxu0 0.0
    %608 = vmatpush1.msra.mxu0 0.0
    %609 = vmatprep.subr.mxu0 0.0
    %610 = vmatpush1.msra.mxu0 0.0
    %611 = vmatprep.subr.mxu0 0.0
    %612 = vmatpush1.msra.mxu0 0.0
    %613 = vmatprep.subr.mxu0 0.0
    %614 = vmatpush1.msra.mxu0 0.0
    %615 = vmatprep.subr.mxu0 0.0
    %616 = vmatpush1.msra.mxu0 0.0
    %617 = vmatprep.subr.mxu0 0.0
    %618 = vmatpush1.msra.mxu0 0.0
    %619 = vmatprep.subr.mxu0 0.0
    %620 = vmatpush1.msra.mxu0 0.0
    %621 = vmatprep.subr.mxu0 0.0
    %622 = vmatpush1.msra.mxu0 0.0
    %623 = vmatprep.subr.mxu0 0.0
    %624 = vmatpush1.msra.mxu0 0.0
    %625 = vmatprep.subr.mxu0 0.0
    %626 = vmatpush1.msra.mxu0 0.0
    %627 = vmatprep.subr.mxu0 0.0
    %628 = vmatpush1.msra.mxu0 0.0
    %629 = vmatprep.subr.mxu0 0.0
    %630 = vmatpush1.msra.mxu0 0.0
    %631 = vmatprep.subr.mxu0 0.0
    %632 = vmatpush1.msra.mxu0 0.0
    %633 = vmatprep.subr.mxu0 0.0
    %634 = vmatpush1.msra.mxu0 0.0
    %635 = vmatprep.subr.mxu0 0.0
    %636 = vmatpush1.msra.mxu0 0.0
    %637 = vmatprep.mubr.f32.mxu0 0.0
    %638 = vmatmul.mubr.f32.gmra.mrb[0].mxu0 %v429
    %v639 = vpop.f32.mrb[0].mxu0
    %v640 = vadd.f32 0.0, %v639
    %v641 = vpop.f32.mrb[0].mxu0
    %v642 = vadd.f32 0.0, %v641
    %643 = vdwg.mxu0
    %644 = vmatprep.subr.mxu0 %v411
    %645 = vmatpush1.msra.mxu0 %v410
    %646 = vmatprep.subr.mxu0 %v419
    %647 = vmatpush1.msra.mxu0 %v418
    %648 = vmatprep.subr.mxu0 %v427
    %649 = vmatpush1.msra.mxu0 %v426
    %650 = vmatprep.subr.mxu0 0.0
    %651 = vmatpush1.msra.mxu0 0.0
    %652 = vmatprep.subr.mxu0 0.0
    %653 = vmatpush1.msra.mxu0 0.0
    %654 = vmatprep.subr.mxu0 0.0
    %655 = vmatpush1.msra.mxu0 0.0
    %656 = vmatprep.subr.mxu0 0.0
    %657 = vmatpush1.msra.mxu0 0.0
    %658 = vmatprep.subr.mxu0 0.0
    %659 = vmatpush1.msra.mxu0 0.0
    %660 = vmatprep.subr.mxu0 0.0
    %661 = vmatpush1.msra.mxu0 0.0
    %662 = vmatprep.subr.mxu0 0.0
    %663 = vmatpush1.msra.mxu0 0.0
    %664 = vmatprep.subr.mxu0 0.0
    %665 = vmatpush1.msra.mxu0 0.0
    %666 = vmatprep.subr.mxu0 0.0
    %667 = vmatpush1.msra.mxu0 0.0
    %668 = vmatprep.subr.mxu0 0.0
    %669 = vmatpush1.msra.mxu0 0.0
    %670 = vmatprep.subr.mxu0 0.0
    %671 = vmatpush1.msra.mxu0 0.0
    %672 = vmatprep.subr.mxu0 0.0
    %673 = vmatpush1.msra.mxu0 0.0
    %674 = vmatprep.subr.mxu0 0.0
    %675 = vmatpush1.msra.mxu0 0.0
    %676 = vmatprep.subr.mxu0 0.0
    %677 = vmatpush1.msra.mxu0 0.0
    %678 = vmatprep.subr.mxu0 0.0
    %679 = vmatpush1.msra.mxu0 0.0
    %680 = vmatprep.subr.mxu0 0.0
    %681 = vmatpush1.msra.mxu0 0.0
    %682 = vmatprep.subr.mxu0 0.0
    %683 = vmatpush1.msra.mxu0 0.0
    %684 = vmatprep.subr.mxu0 0.0
    %685 = vmatpush1.msra.mxu0 0.0
    %686 = vmatprep.subr.mxu0 0.0
    %687 = vmatpush1.msra.mxu0 0.0
    %688 = vmatprep.subr.mxu0 0.0
    %689 = vmatpush1.msra.mxu0 0.0
    %690 = vmatprep.subr.mxu0 0.0
    %691 = vmatpush1.msra.mxu0 0.0
    %692 = vmatprep.subr.mxu0 0.0
    %693 = vmatpush1.msra.mxu0 0.0
    %694 = vmatprep.subr.mxu0 0.0
    %695 = vmatpush1.msra.mxu0 0.0
    %696 = vmatprep.subr.mxu0 0.0
    %697 = vmatpush1.msra.mxu0 0.0
    %698 = vmatprep.subr.mxu0 0.0
    %699 = vmatpush1.msra.mxu0 0.0
    %700 = vmatprep.subr.mxu0 0.0
    %701 = vmatpush1.msra.mxu0 0.0
    %702 = vmatprep.subr.mxu0 0.0
    %703 = vmatpush1.msra.mxu0 0.0
    %704 = vmatprep.subr.mxu0 0.0
    %705 = vmatpush1.msra.mxu0 0.0
    %706 = vmatprep.subr.mxu0 0.0
    %707 = vmatpush1.msra.mxu0 0.0
    %708 = vmatprep.mubr.f32.mxu0 0.0
    %709 = vmatmul.mubr.f32.gmra.mrb[0].mxu0 %v429
    %v710 = vpop.f32.mrb[0].mxu0
    %v711 = vadd.f32 0.0, %v710
    %v712 = vpop.f32.mrb[0].mxu0
    %v713 = vadd.f32 0.0, %v712
    %714 = vdwg.mxu0
    %vm715 = vcmask 64512
    %v717 = vsel %vm715, %v53, 0
    %v720 = vsel %vm715, %v54, 0
    %722 = vmatprep.subr.mxu0 0.0
    %723 = vmatpush1.msra.mxu0 %v498
    %724 = vmatprep.subr.mxu0 0.0
    %725 = vmatpush1.msra.mxu0 0.0
    %726 = vmatprep.subr.mxu0 0.0
    %727 = vmatpush1.msra.mxu0 0.0
    %728 = vmatprep.subr.mxu0 0.0
    %729 = vmatpush1.msra.mxu0 0.0
    %730 = vmatprep.subr.mxu0 0.0
    %731 = vmatpush1.msra.mxu0 0.0
    %732 = vmatprep.subr.mxu0 0.0
    %733 = vmatpush1.msra.mxu0 0.0
    %734 = vmatprep.subr.mxu0 0.0
    %735 = vmatpush1.msra.mxu0 0.0
    %736 = vmatprep.subr.mxu0 0.0
    %737 = vmatpush1.msra.mxu0 0.0
    %738 = vmatprep.subr.mxu0 0.0
    %739 = vmatpush1.msra.mxu0 0.0
    %740 = vmatprep.subr.mxu0 0.0
    %741 = vmatpush1.msra.mxu0 0.0
    %742 = vmatprep.subr.mxu0 0.0
    %743 = vmatpush1.msra.mxu0 0.0
    %744 = vmatprep.subr.mxu0 0.0
    %745 = vmatpush1.msra.mxu0 0.0
    %746 = vmatprep.subr.mxu0 0.0
    %747 = vmatpush1.msra.mxu0 0.0
    %748 = vmatprep.subr.mxu0 0.0
    %749 = vmatpush1.msra.mxu0 0.0
    %750 = vmatprep.subr.mxu0 0.0
    %751 = vmatpush1.msra.mxu0 0.0
    %752 = vmatprep.subr.mxu0 0.0
    %753 = vmatpush1.msra.mxu0 0.0
    %754 = vmatprep.subr.mxu0 0.0
    %755 = vmatpush1.msra.mxu0 0.0
    %756 = vmatprep.subr.mxu0 0.0
    %757 = vmatpush1.msra.mxu0 0.0
    %758 = vmatprep.subr.mxu0 0.0
    %759 = vmatpush1.msra.mxu0 0.0
    %760 = vmatprep.subr.mxu0 0.0
    %761 = vmatpush1.msra.mxu0 0.0
    %762 = vmatprep.subr.mxu0 0.0
    %763 = vmatpush1.msra.mxu0 0.0
    %764 = vmatprep.subr.mxu0 0.0
    %765 = vmatpush1.msra.mxu0 0.0
    %766 = vmatprep.subr.mxu0 0.0
    %767 = vmatpush1.msra.mxu0 0.0
    %768 = vmatprep.subr.mxu0 0.0
    %769 = vmatpush1.msra.mxu0 0.0
    %770 = vmatprep.subr.mxu0 0.0
    %771 = vmatpush1.msra.mxu0 0.0
    %772 = vmatprep.subr.mxu0 0.0
    %773 = vmatpush1.msra.mxu0 0.0
    %774 = vmatprep.subr.mxu0 0.0
    %775 = vmatpush1.msra.mxu0 0.0
    %776 = vmatprep.subr.mxu0 0.0
    %777 = vmatpush1.msra.mxu0 0.0
    %778 = vmatprep.subr.mxu0 0.0
    %779 = vmatpush1.msra.mxu0 0.0
    %780 = vmatprep.subr.mxu0 0.0
    %781 = vmatpush1.msra.mxu0 0.0
    %782 = vmatprep.subr.mxu0 0.0
    %783 = vmatpush1.msra.mxu0 0.0
    %784 = vmatprep.subr.mxu0 0.0
    %785 = vmatpush1.msra.mxu0 0.0
    %786 = vmatprep.mubr.f32.mxu0 0.0
    %787 = vmatmul.mubr.f32.gmra.mrb[0].mxu0 %v717
    %v788 = vpop.f32.mrb[0].mxu0
    %v789 = vadd.f32 0.0, %v788
    %v790 = vpop.f32.mrb[0].mxu0
    %791 = vmatprep.mubr.f32.mxu0 0.0
    %792 = vmatmul.mubr.f32.gmra.mrb[0].mxu0 %v720
    %v793 = vpop.f32.mrb[0].mxu0
    %v794 = vadd.f32 0.0, %v793
    %v795 = vpop.f32.mrb[0].mxu0
    %796 = vdwg.mxu0
    %v797 = vmul.f32 %v789, %v500
    %v798 = vrot.slane %v797, 4
    %v799 = vadd.f32 %v797, %v798
    %v800 = vrot.slane %v799, 2
    %v801 = vadd.f32 %v799, %v800
    %v802 = vrot.slane %v801, 1
    %v803 = vadd.f32 %v801, %v802
    %v804 = vmul.f32 %v794, %v569
    %v805 = vrot.slane %v804, 4
    %v806 = vadd.f32 %v804, %v805
    %v807 = vrot.slane %v806, 2
    %v808 = vadd.f32 %v806, %v807
    %v809 = vrot.slane %v808, 1
    %v810 = vadd.f32 %v808, %v809
    %v812 = vsel %vm715, %v55, 0
    %814 = vmatprep.subr.mxu0 %v642
    %815 = vmatpush1.msra.mxu0 %v640
    %816 = vmatprep.subr.mxu0 0.0
    %817 = vmatpush1.msra.mxu0 0.0
    %818 = vmatprep.subr.mxu0 0.0
    %819 = vmatpush1.msra.mxu0 0.0
    %820 = vmatprep.subr.mxu0 0.0
    %821 = vmatpush1.msra.mxu0 0.0
    %822 = vmatprep.subr.mxu0 0.0
    %823 = vmatpush1.msra.mxu0 0.0
    %824 = vmatprep.subr.mxu0 0.0
    %825 = vmatpush1.msra.mxu0 0.0
    %826 = vmatprep.subr.mxu0 0.0
    %827 = vmatpush1.msra.mxu0 0.0
    %828 = vmatprep.subr.mxu0 0.0
    %829 = vmatpush1.msra.mxu0 0.0
    %830 = vmatprep.subr.mxu0 0.0
    %831 = vmatpush1.msra.mxu0 0.0
    %832 = vmatprep.subr.mxu0 0.0
    %833 = vmatpush1.msra.mxu0 0.0
    %834 = vmatprep.subr.mxu0 0.0
    %835 = vmatpush1.msra.mxu0 0.0
    %836 = vmatprep.subr.mxu0 0.0
    %837 = vmatpush1.msra.mxu0 0.0
    %838 = vmatprep.subr.mxu0 0.0
    %839 = vmatpush1.msra.mxu0 0.0
    %840 = vmatprep.subr.mxu0 0.0
    %841 = vmatpush1.msra.mxu0 0.0
    %842 = vmatprep.subr.mxu0 0.0
    %843 = vmatpush1.msra.mxu0 0.0
    %844 = vmatprep.subr.mxu0 0.0
    %845 = vmatpush1.msra.mxu0 0.0
    %846 = vmatprep.subr.mxu0 0.0
    %847 = vmatpush1.msra.mxu0 0.0
    %848 = vmatprep.subr.mxu0 0.0
    %849 = vmatpush1.msra.mxu0 0.0
    %850 = vmatprep.subr.mxu0 0.0
    %851 = vmatpush1.msra.mxu0 0.0
    %852 = vmatprep.subr.mxu0 0.0
    %853 = vmatpush1.msra.mxu0 0.0
    %854 = vmatprep.subr.mxu0 0.0
    %855 = vmatpush1.msra.mxu0 0.0
    %856 = vmatprep.subr.mxu0 0.0
    %857 = vmatpush1.msra.mxu0 0.0
    %858 = vmatprep.subr.mxu0 0.0
    %859 = vmatpush1.msra.mxu0 0.0
    %860 = vmatprep.subr.mxu0 0.0
    %861 = vmatpush1.msra.mxu0 0.0
    %862 = vmatprep.subr.mxu0 0.0
    %863 = vmatpush1.msra.mxu0 0.0
    %864 = vmatprep.subr.mxu0 0.0
    %865 = vmatpush1.msra.mxu0 0.0
    %866 = vmatprep.subr.mxu0 0.0
    %867 = vmatpush1.msra.mxu0 0.0
    %868 = vmatprep.subr.mxu0 0.0
    %869 = vmatpush1.msra.mxu0 0.0
    %870 = vmatprep.subr.mxu0 0.0
    %871 = vmatpush1.msra.mxu0 0.0
    %872 = vmatprep.subr.mxu0 0.0
    %873 = vmatpush1.msra.mxu0 0.0
    %874 = vmatprep.subr.mxu0 0.0
    %875 = vmatpush1.msra.mxu0 0.0
    %876 = vmatprep.subr.mxu0 0.0
    %877 = vmatpush1.msra.mxu0 0.0
    %878 = vmatprep.mubr.f32.mxu0 0.0
    %879 = vmatmul.mubr.f32.gmra.mrb[0].mxu0 %v812
    %v880 = vpop.f32.mrb[0].mxu0
    %v881 = vadd.f32 0.0, %v880
    %v882 = vpop.f32.mrb[0].mxu0
    %v883 = vadd.f32 0.0, %v882
    %884 = vdwg.mxu0
    %v885 = vmul.f32 %v881, %v711
    %v886 = vmul.f32 %v883, %v713
    %v887 = vrot.slane %v885, 4
    %v888 = vadd.f32 %v885, %v887
    %v889 = vrot.slane %v888, 2
    %v890 = vadd.f32 %v888, %v889
    %v891 = vrot.slane %v890, 1
    %v892 = vadd.f32 %v890, %v891
    %v893 = vrot.slane %v886, 4
    %v894 = vadd.f32 %v886, %v893
    %v895 = vrot.slane %v894, 2
    %v896 = vadd.f32 %v894, %v895
    %v897 = vrot.slane %v896, 1
    %v898 = vadd.f32 %v896, %v897
    %v899 = vadd.f32 %v892, %v898
    %901 = vset.pattern.permute.xlu0 8
    %902 = vperm.xlu0 %901, %v56
    %v903 = vpop.permute.xlu0 %902
    %v905 = vsel %vm715, %v56, 0
    %907 = vmatprep.subr.mxu0 0.0
    %908 = vmatpush1.msra.mxu0 %v571
    %909 = vmatprep.subr.mxu0 0.0
    %910 = vmatpush1.msra.mxu0 0.0
    %911 = vmatprep.subr.mxu0 0.0
    %912 = vmatpush1.msra.mxu0 0.0
    %913 = vmatprep.subr.mxu0 0.0
    %914 = vmatpush1.msra.mxu0 0.0
    %915 = vmatprep.subr.mxu0 0.0
    %916 = vmatpush1.msra.mxu0 0.0
    %917 = vmatprep.subr.mxu0 0.0
    %918 = vmatpush1.msra.mxu0 0.0
    %919 = vmatprep.subr.mxu0 0.0
    %920 = vmatpush1.msra.mxu0 0.0
    %921 = vmatprep.subr.mxu0 0.0
    %922 = vmatpush1.msra.mxu0 0.0
    %923 = vmatprep.subr.mxu0 0.0
    %924 = vmatpush1.msra.mxu0 0.0
    %925 = vmatprep.subr.mxu0 0.0
    %926 = vmatpush1.msra.mxu0 0.0
    %927 = vmatprep.subr.mxu0 0.0
    %928 = vmatpush1.msra.mxu0 0.0
    %929 = vmatprep.subr.mxu0 0.0
    %930 = vmatpush1.msra.mxu0 0.0
    %931 = vmatprep.subr.mxu0 0.0
    %932 = vmatpush1.msra.mxu0 0.0
    %933 = vmatprep.subr.mxu0 0.0
    %934 = vmatpush1.msra.mxu0 0.0
    %935 = vmatprep.subr.mxu0 0.0
    %936 = vmatpush1.msra.mxu0 0.0
    %937 = vmatprep.subr.mxu0 0.0
    %938 = vmatpush1.msra.mxu0 0.0
    %939 = vmatprep.subr.mxu0 0.0
    %940 = vmatpush1.msra.mxu0 0.0
    %941 = vmatprep.subr.mxu0 0.0
    %942 = vmatpush1.msra.mxu0 0.0
    %943 = vmatprep.subr.mxu0 0.0
    %944 = vmatpush1.msra.mxu0 0.0
    %945 = vmatprep.subr.mxu0 0.0
    %946 = vmatpush1.msra.mxu0 0.0
    %947 = vmatprep.subr.mxu0 0.0
    %948 = vmatpush1.msra.mxu0 0.0
    %949 = vmatprep.subr.mxu0 0.0
    %950 = vmatpush1.msra.mxu0 0.0
    %951 = vmatprep.subr.mxu0 0.0
    %952 = vmatpush1.msra.mxu0 0.0
    %953 = vmatprep.subr.mxu0 0.0
    %954 = vmatpush1.msra.mxu0 0.0
    %955 = vmatprep.subr.mxu0 0.0
    %956 = vmatpush1.msra.mxu0 0.0
    %957 = vmatprep.subr.mxu0 0.0
    %958 = vmatpush1.msra.mxu0 0.0
    %959 = vmatprep.subr.mxu0 0.0
    %960 = vmatpush1.msra.mxu0 0.0
    %961 = vmatprep.subr.mxu0 0.0
    %962 = vmatpush1.msra.mxu0 0.0
    %963 = vmatprep.subr.mxu0 0.0
    %964 = vmatpush1.msra.mxu0 0.0
    %965 = vmatprep.subr.mxu0 0.0
    %966 = vmatpush1.msra.mxu0 0.0
    %967 = vmatprep.subr.mxu0 0.0
    %968 = vmatpush1.msra.mxu0 0.0
    %969 = vmatprep.subr.mxu0 0.0
    %970 = vmatpush1.msra.mxu0 0.0
    %971 = vmatprep.mubr.f32.mxu0 0.0
    %972 = vmatmul.mubr.f32.gmra.mrb[0].mxu0 %v905
    %v973 = vpop.f32.mrb[0].mxu0
    %v974 = vadd.f32 %v903, %v973
    %v975 = vpop.f32.mrb[0].mxu0
    %976 = vdwg.mxu0
    %v977 = vlaneseq
    %v978 = vshrl.u32 %v977, 7
    %vm979 = vcmp.eq.s32.totalorder %v978, 0
    %vm980 = vcmp.eq.s32.totalorder %v978, 1
    %v981 = vsel %vm980, %v810, %v899
    %v982 = vsel %vm979, %v803, %v981
    %v983 = vadd.f32 %v982, %v974
    %984 = vset.pattern.permute.xlu0 9
    %985 = vperm.xlu0 %984, %v56
    %v986 = vpop.permute.xlu0 %985
    %v988 = vadd.f32 %v983, %v986
    %v989 = vtanh.pop %v988
    %990 = vset.pattern.permute.xlu0 10
    %991 = vperm.xlu0 %990, %v56
    %v992 = vpop.permute.xlu0 %991
    %v994 = vmul.f32 %v989, %v992
    %vm995 = vcmask 1042432
    %v996 = vsel %vm995, %v994, 0.0
    %v997 = vrot.slane %v996, 4
    %v998 = vadd.f32 %v996, %v997
    %v999 = vrot.slane %v998, 2
    %v1000 = vadd.f32 %v998, %v999
    %v1001 = vrot.slane %v1000, 1
    %v1002 = vadd.f32 %v1000, %v1001
    %1003 = vset.pattern.permute.xlu0 11
    %1004 = vperm.xlu0 %1003, %v56
    %v1005 = vpop.permute.xlu0 %1004
    %v1007 = vadd.f32 %v1002, %v1005
    %1008 = vst [vmem:[%s5] sm:$0x1] %v1007
    %v1009 = vlaneseq
    %v1010 = vand.u32 %v1009, 127
    %vm1011 = vcmp.lt.s32.totalorder %v1010, 4
    %v1012 = vsel %vm1011, 1, 0
    %v1013 = vcvt.s32.f32 %v1012
    %vm1014 = vcmp.ge.s32.totalorder %v1010, 4
    %vm1015 = vcmp.lt.s32.totalorder %v1010, 8
    %vm1016 = vmand %vm1014, %vm1015
    %v1017 = vsel %vm1016, 1, 0
    %v1018 = vcvt.s32.f32 %v1017
    %v1019 = vmul.f32 %v1007, %v1018
    %vm1020 = vcmask 1040384
    %v1021 = vsel %vm1020, %v1019, 0.0
    %1022 = vadd.xlane.f32.xlu0 %v1021
    %v1023 = vpop.xlane.xlu0 %1022
    %v1024 = vrcp.pop 4.0
    %v1025 = vmul.f32 %v1023, %v1024
    %v1026 = vsub.f32 %v1025, %v1007
    %v1027 = vmul.f32 %v1026, 1.442695
    %v1028 = vpow.pop %v1027
    %v1029 = vadd.f32 %v1028, 1.0
    %v1030 = vlog2.pop %v1029
    %v1031 = vmul.f32 %v1030, 0.6931472
    %v1032 = vmul.f32 %v1031, %v1013
    %v1033 = vsel %vm1020, %v1032, 0.0
    %1034 = vadd.xlane.f32.xlu0 %v1033
    %v1035 = vpop.xlane.xlu0 %1034
    %v1036 = vmul.f32 %v1035, %v1024
    %vm1037 = vcmask 0
    %1038 = vst.msk [vmem:[#allocation7] sm:$0x1] %vm1037, %v1036
    // Predicated region
    $region26: #{hnepy_forward_pallas.1} parent=1 // pred_check
      _
    $region27: #{hnepy_forward_pallas.1} parent=1 // pred_check_branch
      %1040 = sbr.rel (0) target = $region29
    $region28: #{hnepy_forward_pallas.1} parent=1 // pred_region
      %s1042 = ssub.s32 16, 16
      %1043 = vsyncadd [#allocation4], %s1042
      %s1045 = sshll.u32 [#allocation7], 4
      %s1046 = int_to_ptr.vmem [resolvable:$true] %s1045
      %1048 = dma.vmem_to_hbm [thread:$0]  %s1046, 16, %s4, [#allocation4]
    $region29: #{hnepy_forward_pallas.1} parent=1 // pred_fallthru
      _
    // Predicated region
    $region30: #{hnepy_forward_pallas.1} parent=1 // pred_check
      _
    $region31: #{hnepy_forward_pallas.1} parent=1 // pred_check_branch
      %1050 = sbr.rel (0) target = $region33
    $region32: #{hnepy_forward_pallas.1} parent=1 // pred_region
      _
    $region33: #{hnepy_forward_pallas.1} parent=1 // pred_fallthru
      _
    // Predicated region
    $region34: #{hnepy_forward_pallas.1} parent=1 // pred_check
      _
    $region35: #{hnepy_forward_pallas.1} parent=1 // pred_check_branch
      %1052 = sbr.rel (0) target = $region37
    $region36: #{hnepy_forward_pallas.1} parent=1 // pred_region
      %1053 = dma.done [#allocation4], 16
    $region37: #{hnepy_forward_pallas.1} parent=1 // pred_fallthru
      _
    // Predicated region
    $region38: #{hnepy_forward_pallas.1} parent=1 // pred_check
      _
    $region39: #{hnepy_forward_pallas.1} parent=1 // pred_check_branch
      %1055 = sbr.rel (0) target = $region41
    $region40: #{hnepy_forward_pallas.1} parent=1 // pred_region
      _
    $region41: #{hnepy_forward_pallas.1} parent=1 // pred_fallthru
      _
    %1056 = vsyncpa [#allocation3], 1
    %1057 = vsyncpa [#allocation6], 1
    %1058 = vsyncpa [#allocation4], 1

</llo_original>
